<compile_context>
chip_gen: v7x
topology: tpu7x:2x2x1
jax: 0.10.0
libtpu: 0.0.40
codegen_flags: <defaults>
</compile_context>

<pallas_src>
import functools

import jax
import jax.numpy as jnp
from jax import lax
from jax.experimental import pallas as pl
from jax.experimental.pallas import tpu as pltpu


# ----------------------------------------------------------------------------
# Plain-JAX bidirectional LSTM encoder (PyTorch packed-sequence semantics,
# eval mode: inter-layer dropout = identity).
# TODO(synk): the LSTM recurrence stays in plain JAX (a sequential scan has no
# clean Pallas tile decomposition at these tiny shapes).
# ----------------------------------------------------------------------------
def _lstm_cell(x, h, c, Wih, Whh, bih, bhh):
    gates = x @ Wih.T + h @ Whh.T + bih + bhh
    i, f, g, o = jnp.split(gates, 4, axis=-1)
    i = jax.nn.sigmoid(i)
    f = jax.nn.sigmoid(f)
    g = jnp.tanh(g)
    o = jax.nn.sigmoid(o)
    c_new = f * c + i * g
    h_new = o * jnp.tanh(c_new)
    return h_new, c_new


def _run_dir(x, lengths, params):
    # x: (B, T, D) -> outputs (B, T, H); zeros at padded positions.
    Wih, Whh, bih, bhh = params
    B, T, _ = x.shape
    H = Whh.shape[1]
    h0 = jnp.zeros((B, H), jnp.float32)
    c0 = jnp.zeros((B, H), jnp.float32)

    def step(carry, inp):
        h, c = carry
        xt, t = inp
        hn, cn = _lstm_cell(xt, h, c, Wih, Whh, bih, bhh)
        m = (t < lengths)[:, None]
        h = jnp.where(m, hn, h)
        c = jnp.where(m, cn, c)
        out = jnp.where(m, hn, 0.0)
        return (h, c), out

    xs = (jnp.transpose(x, (1, 0, 2)), jnp.arange(T))
    _, outs = lax.scan(step, (h0, c0), xs)
    return jnp.transpose(outs, (1, 0, 2))


def _reverse_padded(x, lengths):
    # Reverse each sequence within its valid length (packed-sequence style).
    T = x.shape[1]
    t = jnp.arange(T)
    idx = jnp.clip(lengths[:, None] - 1 - t[None, :], 0, T - 1)
    return jnp.take_along_axis(x, idx[:, :, None], axis=1)


def bilstm_encode(x, lengths, layer_params, out_dtype=None):
    # layer_params: list over layers of (fwd_params, bwd_params).
    # out_dtype (e.g. bf16) is applied at the FINAL concat so the f32 encoder
    # output is never materialized in HBM (avoids an extra memory pass).
    inp = x
    T = x.shape[1]
    mask = (jnp.arange(T)[None, :] < lengths[:, None])[:, :, None]
    n_layers = len(layer_params)
    for li, (pf, pb) in enumerate(layer_params):
        out_f = _run_dir(inp, lengths, pf)
        x_rev = _reverse_padded(inp, lengths)
        out_b_rev = _run_dir(x_rev, lengths, pb)
        out_b = jnp.where(mask, _reverse_padded(out_b_rev, lengths), 0.0)
        if out_dtype is not None and li == n_layers - 1:
            out_f = out_f.astype(out_dtype)
            out_b = out_b.astype(out_dtype)
        inp = jnp.concatenate([out_f, out_b], axis=-1)
    return inp


# ----------------------------------------------------------------------------
# Pallas kernel: fused sa_out MLP (Linear -> Tanh -> Linear) + per-batch
# sequence sum for TB batch elements per grid step.
# ----------------------------------------------------------------------------
def _make_sap_kernel(TB, Lp, mL_n, Hp, NP):
    def kernel(x_ref,              # (TB, Lp, Hp)  bf16 encoder outputs (lane-dense)
               w1_ref, b1_ref,      # (Hp, Hp) bf16, (1, Hp) f32
               w2_ref, b2_ref,      # (Hp, NP) bf16, (1, NP) f32   (lane-padded)
               o_ref):              # (1, TB, NP)   f32
        # Merge (TB, Lp) into one flattened M dim for the MXU. Lp % 16 == 0 and
        # Hp % 128 == 0, so the reshape is tile-aligned (no VMEM copy).
        x = x_ref[...].reshape(TB * Lp, Hp)
        # layer 1: Linear + Tanh (bf16 MXU operands, f32 accumulate/elementwise)
        h1 = jnp.tanh(
            jnp.dot(x, w1_ref[...], preferred_element_type=jnp.float32)
            + b1_ref[...])
        # layer 2: Linear (lane-dense N = NP)
        s = jnp.dot(h1.astype(jnp.bfloat16), w2_ref[...],
                    preferred_element_type=jnp.float32) + b2_ref[...]   # (TB*Lp, NP)
        # per-batch sum over the mL_n sequence positions: tile-aligned split,
        # VPU select on the seq-padding rows (>= mL_n), sublane (XLU) reduce.
        s = s.reshape(TB, Lp, NP)
        if Lp != mL_n:
            t = lax.broadcasted_iota(jnp.int32, (TB, Lp, NP), 1)
            s = jnp.where(t < mL_n, s, 0.0)
        o_ref[0] = jnp.sum(s, axis=1)                                   # (TB, NP)
    return kernel


def _choose_blocks(bS, Lp, *, target_m=1024):
    # TB batch rows per grid step so the flattened M = TB*Lp targets ~target_m
    # (amortizes ~0.35us/step overhead, fills the 256-wide v6e/v7x MXU).
    tb = max(1, min(bS, max(1, target_m // Lp)))
    nb = pl.cdiv(bS, tb)
    if bS >= 2:
        # v7x megacore: prefer an even number of (parallel) grid steps >= 2 so
        # dimension_semantics=("parallel",) can balance the 2 TensorCores.
        if nb < 2:
            nb = 2
        if nb % 2:
            nb += 1
        tb = pl.cdiv(bS, nb)
        nb = pl.cdiv(bS, tb)
    return tb, nb


def sap_agg_pallas(wenc_n, w1, b1, w2, b2, *, target_m=1024):
    """s_sa = (tanh(wenc_n @ w1.T + b1) @ w2.T + b2).sum(axis=1)

    wenc_n: (bS, mL_n, hS) encoder outputs (zeros at padded positions), bf16 or f32
    w1: (hS, hS), b1: (hS,)       -- sa_out[0]
    w2: (n_agg, hS), b2: (n_agg,) -- sa_out[2]
    """
    bS, mL_n, hS = wenc_n.shape
    n_agg = w2.shape[0]

    # seq dim padded to a multiple of 16 sublanes (bf16 tiling); pad rows are
    # excluded from the sum inside the kernel.
    Lp = ((mL_n + 15) // 16) * 16
    # feature dim padded to a full 128-lane tile (exact: tanh(0+0)=0 columns
    # hit zero rows of w2).
    Hp = ((hS + 127) // 128) * 128
    # output lanes padded to a full 128-lane tile -> unmasked stores.
    NP = ((n_agg + 127) // 128) * 128

    TB, nb = _choose_blocks(bS, Lp, target_m=target_m)
    bS_pad = TB * nb

    # One bf16 copy of the activations in HBM; pads fuse into the producer under jit.
    x = wenc_n.astype(jnp.bfloat16)   # no-op if the encoder already emits bf16
    x = jnp.pad(x, ((0, bS_pad - bS), (0, Lp - mL_n), (0, Hp - hS)))

    w1p = jnp.zeros((Hp, Hp), jnp.bfloat16).at[:hS, :hS].set(w1.T.astype(jnp.bfloat16))
    b1p = jnp.zeros((1, Hp), jnp.float32).at[:, :hS].set(b1.astype(jnp.float32))
    w2p = jnp.zeros((Hp, NP), jnp.bfloat16).at[:hS, :n_agg].set(w2.T.astype(jnp.bfloat16))
    b2p = jnp.zeros((1, NP), jnp.float32).at[:, :n_agg].set(b2.astype(jnp.float32))

    kernel = _make_sap_kernel(TB, Lp, mL_n, Hp, NP)

    in_specs = [
        # TODO(synk): sweep pipeline_mode=pl.Buffered(3) here only if a profile
        # shows exposed DMA once TB is large (VMEM-cheap, revert if tight on v7x).
        pl.BlockSpec((TB, Lp, Hp), lambda i: (i, 0, 0)),
        pl.BlockSpec((Hp, Hp), lambda i: (0, 0)),
        pl.BlockSpec((1, Hp), lambda i: (0, 0)),
        pl.BlockSpec((Hp, NP), lambda i: (0, 0)),
        pl.BlockSpec((1, NP), lambda i: (0, 0)),
    ]
    out_spec = pl.BlockSpec((1, TB, NP), lambda i: (i, 0, 0))

    out = pl.pallas_call(
        kernel,
        out_shape=jax.ShapeDtypeStruct((nb, TB, NP), jnp.float32),
        grid_spec=pltpu.PrefetchScalarGridSpec(
            num_scalar_prefetch=0,
            grid=(nb,),
            in_specs=in_specs,
            out_specs=out_spec),
        compiler_params=pltpu.CompilerParams(
            dimension_semantics=("parallel",)),   # v7x: shard batch over 2 TCs
    )(x, w1p, b1p, w2p, b2p)

    return out.reshape(bS_pad, NP)[:bS, :n_agg]


# ----------------------------------------------------------------------------
# Seq2SQL_v1_agg.forward (only the SAP_agg branch is computed, as in the spec).
# ----------------------------------------------------------------------------
def seq2sql_v1_agg_forward(enc_n_params, sa_params, wemb_n, l_n,
                           wemb_h=None, l_hpu=None, l_hs=None):
    wenc_n = bilstm_encode(wemb_n, l_n, enc_n_params,
                           out_dtype=jnp.bfloat16)           # (bS, mL_n, hS) bf16
    w1, b1, w2, b2 = sa_params
    s_sa = sap_agg_pallas(wenc_n, w1, b1, w2, b2)
    return (None, s_sa, None, None, None, None)


# ----------------------------------------------------------------------------
# Pure-JAX reference of the post-encoder math (sanity check only).
# ----------------------------------------------------------------------------
def ref_sa_out(wenc_n, w1, b1, w2, b2):
    h1 = jnp.tanh(wenc_n @ w1.T + b1)
    s = h1 @ w2.T + b2
    return s.sum(axis=1)


if __name__ == "__main__":
    # ---- small, module-consistent shapes --------------------------------
    bS, iS, hS, lS, n_agg_ops = 2, 32, 32, 2, 6
    H2 = hS // 2
    l_n = [8, 6]
    mL_n = max(l_n)
    # header-side inputs exist in the signature but are unused by SAP_agg
    l_hpu = [4, 3, 5, 2, 4]
    l_hs = [3, 2]
    mL_hpu = max(l_hpu)

    # ---- deterministic parameter / input init ---------------------------
    keys = iter(jax.random.split(jax.random.PRNGKey(0), 256))

    def nxt(shape, scale=0.1):
        return scale * jax.random.normal(next(keys), shape, dtype=jnp.float32)

    def make_lstm_params(in_size):
        layers = []
        for layer in range(lS):
            d_in = in_size if layer == 0 else 2 * H2
            def mk(d_in=d_in):
                return (nxt((4 * H2, d_in)), nxt((4 * H2, H2)),
                        nxt((4 * H2,)), nxt((4 * H2,)))
            layers.append((mk(), mk()))
        return layers

    enc_n_params = make_lstm_params(iS)

    # sa_out = Sequential(Linear(hS,hS), Tanh(), Linear(hS, n_agg_ops))
    W1 = nxt((hS, hS));        b1 = nxt((hS,))
    W2 = nxt((n_agg_ops, hS)); b2 = nxt((n_agg_ops,))
    sa_params = (W1, b1, W2, b2)

    wemb_n = nxt((bS, mL_n, iS), 0.5)
    wemb_hpu = nxt((len(l_hpu), mL_hpu, iS), 0.5)   # unused by SAP_agg
    l_n_arr = jnp.array(l_n, jnp.int32)

    # ---- forward: plain-JAX BiLSTM glue + Pallas hot path ----------------
    fwd = jax.jit(seq2sql_v1_agg_forward)
    outs = fwd(enc_n_params, sa_params, wemb_n, l_n_arr,
               wemb_hpu, l_hpu, l_hs)
    s_sa = jax.block_until_ready(outs[1])
    assert s_sa.shape == (bS, n_agg_ops)

    # ---- sanity check against a pure-JAX f32 reference of the same math --
    wenc_n_ref = bilstm_encode(wemb_n, l_n_arr, enc_n_params)   # f32
    s_ref = jax.block_until_ready(ref_sa_out(wenc_n_ref, W1, b1, W2, b2))
    assert jnp.allclose(s_sa, s_ref, rtol=2e-2, atol=2e-2)

    print("KERNEL_OK")
</pallas_src>

<mosaic_0001>
module attributes {stable_mosaic.version = 11 : i64} {
  func.func @kernel(%arg0: i32, %arg1: memref<1x16x128xbf16, #tpu.memory_space<vmem>>, %arg2: memref<128x128xbf16, #tpu.memory_space<vmem>>, %arg3: memref<1x128xf32, #tpu.memory_space<vmem>>, %arg4: memref<128x128xbf16, #tpu.memory_space<vmem>>, %arg5: memref<1x128xf32, #tpu.memory_space<vmem>>, %arg6: memref<1x1x128xf32, #tpu.memory_space<vmem>>) attributes {dimension_semantics = [#tpu.dimension_semantics<parallel>], iteration_bounds = array<i64: 2>, scalar_prefetch = 0 : i64, scratch_operands = 0 : i64, tpu.core_type = #tpu.core_type<tc>, window_params = [{transform_indices = @transform_0, window_bounds = array<i64: 1, 16, 128>}, {pipeline_mode = #tpu.pipeline_mode<synchronous>, transform_indices = @transform_1, window_bounds = array<i64: 128, 128>}, {pipeline_mode = #tpu.pipeline_mode<synchronous>, transform_indices = @transform_2, window_bounds = array<i64: 1, 128>}, {pipeline_mode = #tpu.pipeline_mode<synchronous>, transform_indices = @transform_3, window_bounds = array<i64: 128, 128>}, {pipeline_mode = #tpu.pipeline_mode<synchronous>, transform_indices = @transform_4, window_bounds = array<i64: 1, 128>}, {transform_indices = @transform_5, window_bounds = array<i64: 1, 1, 128>}]} {
    %c0 = arith.constant 0 : index
    %c0_0 = arith.constant 0 : index
    %c0_1 = arith.constant 0 : index
    %0 = vector.load %arg1[%c0, %c0_0, %c0_1] : memref<1x16x128xbf16, #tpu.memory_space<vmem>>, vector<1x16x128xbf16>
    %1 = vector.shape_cast %0 : vector<1x16x128xbf16> to vector<16x128xbf16>
    %c0_2 = arith.constant 0 : index
    %c0_3 = arith.constant 0 : index
    %2 = vector.load %arg2[%c0_2, %c0_3] : memref<128x128xbf16, #tpu.memory_space<vmem>>, vector<128x128xbf16>
    %cst = arith.constant dense<0.000000e+00> : vector<16x128xf32>
    %3 = tpu.matmul %1, %2, %cst {dimension_numbers = #tpu.dot_dimension_numbers<[1], [0], [0], [1], [0, 0, 1, 1], [], []>} : vector<16x128xbf16>, vector<128x128xbf16>, vector<16x128xf32> -> vector<16x128xf32>
    %c0_4 = arith.constant 0 : index
    %c0_5 = arith.constant 0 : index
    %4 = vector.load %arg3[%c0_4, %c0_5] : memref<1x128xf32, #tpu.memory_space<vmem>>, vector<1x128xf32>
    %5 = vector.broadcast %4 : vector<1x128xf32> to vector<16x128xf32>
    %6 = arith.addf %3, %5 : vector<16x128xf32>
    %7 = math.tanh %6 : vector<16x128xf32>
    %8 = arith.truncf %7 : vector<16x128xf32> to vector<16x128xbf16>
    %c0_6 = arith.constant 0 : index
    %c0_7 = arith.constant 0 : index
    %9 = vector.load %arg4[%c0_6, %c0_7] : memref<128x128xbf16, #tpu.memory_space<vmem>>, vector<128x128xbf16>
    %cst_8 = arith.constant dense<0.000000e+00> : vector<16x128xf32>
    %10 = tpu.matmul %8, %9, %cst_8 {dimension_numbers = #tpu.dot_dimension_numbers<[1], [0], [0], [1], [0, 0, 1, 1], [], []>} : vector<16x128xbf16>, vector<128x128xbf16>, vector<16x128xf32> -> vector<16x128xf32>
    %c0_9 = arith.constant 0 : index
    %c0_10 = arith.constant 0 : index
    %11 = vector.load %arg5[%c0_9, %c0_10] : memref<1x128xf32, #tpu.memory_space<vmem>>, vector<1x128xf32>
    %12 = vector.broadcast %11 : vector<1x128xf32> to vector<16x128xf32>
    %13 = arith.addf %10, %12 : vector<16x128xf32>
    %14 = vector.shape_cast %13 : vector<16x128xf32> to vector<1x16x128xf32>
    %15 = tpu.iota {dimensions = array<i32: 1>} : vector<1x16x128xi32>
    %c8_i32 = arith.constant 8 : i32
    %16 = vector.broadcast %c8_i32 : i32 to vector<1x16x128xi32>
    %17 = arith.cmpi slt, %15, %16 : vector<1x16x128xi32>
    %cst_11 = arith.constant 0.000000e+00 : f32
    %18 = vector.broadcast %cst_11 : f32 to vector<1x16x128xf32>
    %19 = arith.select %17, %14, %18 : vector<1x16x128xi1>, vector<1x16x128xf32>
    %cst_12 = arith.constant dense<0.000000e+00> : vector<1x128xf32>
    %20 = vector.multi_reduction <add>, %19, %cst_12 [1] : vector<1x16x128xf32> to vector<1x128xf32>
    %c0_13 = arith.constant 0 : index
    %c0_14 = arith.constant 0 : index
    %c0_15 = arith.constant 0 : index
    %21 = vector.load %arg6[%c0_13, %c0_14, %c0_15] : memref<1x1x128xf32, #tpu.memory_space<vmem>>, vector<1x1x128xf32>
    %22 = vector.shape_cast %21 : vector<1x1x128xf32> to vector<1x128xf32>
    %23 = vector.shape_cast %20 : vector<1x128xf32> to vector<1x1x128xf32>
    tpu.vector_store %arg6[%c0_13, %c0_14, %c0_15], %23 {strides = array<i32>} : memref<1x1x128xf32, #tpu.memory_space<vmem>>, vector<1x1x128xf32>,
    return
  }
  func.func @transform_0(%arg0: i32) -> (i32, i32, i32) {
    %c0_i32 = arith.constant 0 : i32
    %c0_i32_0 = arith.constant 0 : i32
    %c0_i32_1 = arith.constant 0 : i32
    return %arg0, %c0_i32, %c0_i32_0 : i32, i32, i32
  }
  func.func @transform_1(%arg0: i32) -> (i32, i32) {
    %c0_i32 = arith.constant 0 : i32
    %c0_i32_0 = arith.constant 0 : i32
    %c0_i32_1 = arith.constant 0 : i32
    return %c0_i32, %c0_i32_0 : i32, i32
  }
  func.func @transform_2(%arg0: i32) -> (i32, i32) {
    %c0_i32 = arith.constant 0 : i32
    %c0_i32_0 = arith.constant 0 : i32
    %c0_i32_1 = arith.constant 0 : i32
    return %c0_i32, %c0_i32_0 : i32, i32
  }
  func.func @transform_3(%arg0: i32) -> (i32, i32) {
    %c0_i32 = arith.constant 0 : i32
    %c0_i32_0 = arith.constant 0 : i32
    %c0_i32_1 = arith.constant 0 : i32
    return %c0_i32, %c0_i32_0 : i32, i32
  }
  func.func @transform_4(%arg0: i32) -> (i32, i32) {
    %c0_i32 = arith.constant 0 : i32
    %c0_i32_0 = arith.constant 0 : i32
    %c0_i32_1 = arith.constant 0 : i32
    return %c0_i32, %c0_i32_0 : i32, i32
  }
  func.func @transform_5(%arg0: i32) -> (i32, i32, i32) {
    %c0_i32 = arith.constant 0 : i32
    %c0_i32_0 = arith.constant 0 : i32
    %c0_i32_1 = arith.constant 0 : i32
    return %arg0, %c0_i32, %c0_i32_0 : i32, i32, i32
  }
}

</mosaic_0001>

<llo_original>
// kernel: custom-call.11
$region0: #{custom-call.11}
  %s0 = inlined_call_operand.vmem [shape: f32[2,16], index: 0, kind: output, shape index: {}]

// kernel: custom-call.10
$region0: #{custom-call.10}
  %s0 = inlined_call_operand.vmem [shape: bf16[2,16], index: 0, kind: output, shape index: {}]

// kernel: seq2sql_v1_agg_forward.1
$region0: #{seq2sql_v1_agg_forward.1}
  #allocation0 [shape = 'u32[]', space=smem, size = 0x4, offset = 0x4, fixed_abs, tag = 'smem constant byte address 0x4 - core index']
  #allocation1 [shape = 'u32[144,128]{1,0:T(1,128)}', space=vmem, size = 0x12000, scoped, tag = 'internal scratch']
  %s0 = inlined_call_operand.vmem [shape: bf16[2,16,128], index: 0, kind: input, shape index: {}]
  %s1 = inlined_call_operand.vmem [shape: bf16[128,128], index: 1, kind: input, shape index: {}]
  %s2 = inlined_call_operand.vmem [shape: f32[1,128], index: 2, kind: input, shape index: {}]
  %s3 = inlined_call_operand.vmem [shape: bf16[128,128], index: 3, kind: input, shape index: {}]
  %s4 = inlined_call_operand.vmem [shape: f32[1,128], index: 4, kind: input, shape index: {}]
  %s5 = inlined_call_operand.hbm [shape: f32[2,1,128], index: 5, kind: output, shape index: {}]
  %s6 = sld [smem:[#allocation0]]
  $region53: #{seq2sql_v1_agg_forward.1} parent=0
    _
  %s8 = ssub.s32 1, %s6
  %s9 = scalar_select 0, %s8, %s6
  $region1: #{seq2sql_v1_agg_forward.1} parent=0
    #allocation2 [shape = 'u8[1024]{0}', space=vmem, size = 0x400, scoped, tag = 'output window, operand 0']
    #allocation3 [shape = 's32[2]{0}', space=sflag, size = 0x8, scoped, tag = 'scoped memory for seq2sql_v1_agg_forward.1']
    %10 = vsyncpa [#allocation3], 0
    %s11 = scalar_lea.sflag [#allocation3], 1
    %12 = vsyncpa %s11, 0
    loop: start=0, step=1, limit=4
    $region2: #{seq2sql_v1_agg_forward.1} parent=1 // loop_pre_header
      _
    $region3: #{seq2sql_v1_agg_forward.1} parent=1 // loop_header
      %s14 = sphi 0, %s18
      %p15 = scmp.ge.s32.totalorder %s14, 4
      %s24 = sphi 0, %s26
      %s27 = sphi 0, %s24
      %s28 = sphi 0, %s27
      %s44 = sphi 0, %s28
      %s48 = sphi 0, %s48
      %s50 = sphi 0, %s48
      %s51 = sphi 0, %s50
      %s65 = sphi 0, %s51
      %s69 = sphi 0, %s69
      %s71 = sphi 0, %s69
      %s72 = sphi 0, %s71
      %s86 = sphi 0, %s72
      %s90 = sphi 0, %s90
      %s92 = sphi 0, %s90
      %s93 = sphi 0, %s92
      %s107 = sphi 0, %s93
      %s111 = sphi 0, %s111
      %s113 = sphi 0, %s111
      %s114 = sphi 0, %s113
      %s128 = sphi 0, %s114
      %s134 = sphi 0, %s136
      %s137 = sphi 0, %s134
      %s138 = sphi 0, %s137
      %s154 = sphi 0, %s138
    $region4: #{seq2sql_v1_agg_forward.1} parent=1 // loop_header_branch
      %17 = sbr.rel (%p15) target = $region8
    $region5: #{seq2sql_v1_agg_forward.1} parent=1 // loop_body
      %s19 = ssub.s32 %s14, 1
      %s20 = ssub.s32 %s14, 2
      %s21 = sadd.s32 %s14, 1
      %s22 = ssub.s32 %s14, %s21
      %p23 = scmp.eq.s32.totalorder %s22, 0
      %s25 = sadd.s32 %s24, 1
      %s26 = scalar_select %p23, %s24, %s25
      %p29 = pneg %p23
      %p30 = scmp.eq.s32.totalorder %s14, 1
      %p31 = por %p29, %p30
      %p32 = scmp.ne.s32.totalorder %s24, %s27
      %p33 = scmp.eq.s32.totalorder %s14, 0
      %p34 = por %p32, %p33
      %p35 = scmp.ne.s32.totalorder %s24, %s27
      %p36 = scmp.eq.s32.totalorder %s19, 1
      %p37 = por %p35, %p36
      %p38 = scmp.ne.s32.totalorder %s27, %s28
      %p39 = scmp.eq.s32.totalorder %s19, 0
      %p40 = por %p38, %p39
      %p41 = scmp.ne.s32.totalorder %s27, %s28
      %p42 = scmp.eq.s32.totalorder %s20, 1
      %p43 = por %p41, %p42
      %p45 = scmp.ne.s32.totalorder %s28, %s44
      %p46 = scmp.eq.s32.totalorder %s20, 0
      %p47 = por %p45, %p46
      %s49 = sadd.s32 %s48, 1
      %p52 = scmp.eq.s32.totalorder %s14, 1
      %p53 = scmp.ne.s32.totalorder %s48, %s50
      %p54 = scmp.eq.s32.totalorder %s14, 0
      %p55 = por %p53, %p54
      %p56 = scmp.ne.s32.totalorder %s48, %s50
      %p57 = scmp.eq.s32.totalorder %s19, 1
      %p58 = por %p56, %p57
      %p59 = scmp.ne.s32.totalorder %s50, %s51
      %p60 = scmp.eq.s32.totalorder %s19, 0
      %p61 = por %p59, %p60
      %p62 = scmp.ne.s32.totalorder %s50, %s51
      %p63 = scmp.eq.s32.totalorder %s20, 1
      %p64 = por %p62, %p63
      %p66 = scmp.ne.s32.totalorder %s51, %s65
      %p67 = scmp.eq.s32.totalorder %s20, 0
      %p68 = por %p66, %p67
      %s70 = sadd.s32 %s69, 1
      %p73 = scmp.eq.s32.totalorder %s14, 1
      %p74 = scmp.ne.s32.totalorder %s69, %s71
      %p75 = scmp.eq.s32.totalorder %s14, 0
      %p76 = por %p74, %p75
      %p77 = scmp.ne.s32.totalorder %s69, %s71
      %p78 = scmp.eq.s32.totalorder %s19, 1
      %p79 = por %p77, %p78
      %p80 = scmp.ne.s32.totalorder %s71, %s72
      %p81 = scmp.eq.s32.totalorder %s19, 0
      %p82 = por %p80, %p81
      %p83 = scmp.ne.s32.totalorder %s71, %s72
      %p84 = scmp.eq.s32.totalorder %s20, 1
      %p85 = por %p83, %p84
      %p87 = scmp.ne.s32.totalorder %s72, %s86
      %p88 = scmp.eq.s32.totalorder %s20, 0
      %p89 = por %p87, %p88
      %s91 = sadd.s32 %s90, 1
      %p94 = scmp.eq.s32.totalorder %s14, 1
      %p95 = scmp.ne.s32.totalorder %s90, %s92
      %p96 = scmp.eq.s32.totalorder %s14, 0
      %p97 = por %p95, %p96
      %p98 = scmp.ne.s32.totalorder %s90, %s92
      %p99 = scmp.eq.s32.totalorder %s19, 1
      %p100 = por %p98, %p99
      %p101 = scmp.ne.s32.totalorder %s92, %s93
      %p102 = scmp.eq.s32.totalorder %s19, 0
      %p103 = por %p101, %p102
      %p104 = scmp.ne.s32.totalorder %s92, %s93
      %p105 = scmp.eq.s32.totalorder %s20, 1
      %p106 = por %p104, %p105
      %p108 = scmp.ne.s32.totalorder %s93, %s107
      %p109 = scmp.eq.s32.totalorder %s20, 0
      %p110 = por %p108, %p109
      %s112 = sadd.s32 %s111, 1
      %p115 = scmp.eq.s32.totalorder %s14, 1
      %p116 = scmp.ne.s32.totalorder %s111, %s113
      %p117 = scmp.eq.s32.totalorder %s14, 0
      %p118 = por %p116, %p117
      %p119 = scmp.ne.s32.totalorder %s111, %s113
      %p120 = scmp.eq.s32.totalorder %s19, 1
      %p121 = por %p119, %p120
      %p122 = scmp.ne.s32.totalorder %s113, %s114
      %p123 = scmp.eq.s32.totalorder %s19, 0
      %p124 = por %p122, %p123
      %p125 = scmp.ne.s32.totalorder %s113, %s114
      %p126 = scmp.eq.s32.totalorder %s20, 1
      %p127 = por %p125, %p126
      %p129 = scmp.ne.s32.totalorder %s114, %s128
      %p130 = scmp.eq.s32.totalorder %s20, 0
      %p131 = por %p129, %p130
      %s132 = ssub.s32 %s14, %s21
      %p133 = scmp.eq.s32.totalorder %s132, 0
      %s135 = sadd.s32 %s134, 1
      %s136 = scalar_select %p133, %s134, %s135
      %p139 = pneg %p133
      %p140 = scmp.eq.s32.totalorder %s14, 1
      %p141 = por %p139, %p140
      %p142 = scmp.ne.s32.totalorder %s134, %s137
      %p143 = scmp.eq.s32.totalorder %s14, 0
      %p144 = por %p142, %p143
      %p145 = scmp.ne.s32.totalorder %s134, %s137
      %p146 = scmp.eq.s32.totalorder %s19, 1
      %p147 = por %p145, %p146
      %p148 = scmp.ne.s32.totalorder %s137, %s138
      %p149 = scmp.eq.s32.totalorder %s19, 0
      %p150 = por %p148, %p149
      %p151 = scmp.ne.s32.totalorder %s137, %s138
      %p152 = scmp.eq.s32.totalorder %s20, 1
      %p153 = por %p151, %p152
      %p155 = scmp.ne.s32.totalorder %s138, %s154
      %p156 = scmp.eq.s32.totalorder %s20, 0
      %p157 = por %p155, %p156
      %p158 = scmp.le.s32.totalorder 1, %s14
      %p159 = scmp.lt.s32.totalorder %s14, 3
      %p160 = pnand %p158, %p159
      %p161 = pneg %p160
      // Predicated region
      $region9: #{seq2sql_v1_agg_forward.1} parent=5 // pred_check
        _
      $region10: #{seq2sql_v1_agg_forward.1} parent=5 // pred_check_branch
        %163 = sbr.rel (%p160) target = $region12
      $region11: #{seq2sql_v1_agg_forward.1} parent=5 // pred_region
        %s164 = ssub.s32 %s14, 1
        // Predicated region
        $region13: #{seq2sql_v1_agg_forward.1} parent=11 // pred_check
          %p165 = pneg %p61
        $region14: #{seq2sql_v1_agg_forward.1} parent=11 // pred_check_branch
          %167 = sbr.rel (%p165) target = $region16
        $region15: #{seq2sql_v1_agg_forward.1} parent=11 // pred_region
          _
        $region16: #{seq2sql_v1_agg_forward.1} parent=11 // pred_fallthru
          _
        // Predicated region
        $region17: #{seq2sql_v1_agg_forward.1} parent=11 // pred_check
          %p168 = pneg %p82
        $region18: #{seq2sql_v1_agg_forward.1} parent=11 // pred_check_branch
          %170 = sbr.rel (%p168) target = $region20
        $region19: #{seq2sql_v1_agg_forward.1} parent=11 // pred_region
          _
        $region20: #{seq2sql_v1_agg_forward.1} parent=11 // pred_fallthru
          _
        // Predicated region
        $region21: #{seq2sql_v1_agg_forward.1} parent=11 // pred_check
          %p171 = pneg %p103
        $region22: #{seq2sql_v1_agg_forward.1} parent=11 // pred_check_branch
          %173 = sbr.rel (%p171) target = $region24
        $region23: #{seq2sql_v1_agg_forward.1} parent=11 // pred_region
          _
        $region24: #{seq2sql_v1_agg_forward.1} parent=11 // pred_fallthru
          _
        // Predicated region
        $region25: #{seq2sql_v1_agg_forward.1} parent=11 // pred_check
          %p174 = pneg %p124
        $region26: #{seq2sql_v1_agg_forward.1} parent=11 // pred_check_branch
          %176 = sbr.rel (%p174) target = $region28
        $region27: #{seq2sql_v1_agg_forward.1} parent=11 // pred_region
          _
        $region28: #{seq2sql_v1_agg_forward.1} parent=11 // pred_fallthru
          _
      $region12: #{seq2sql_v1_agg_forward.1} parent=5 // pred_fallthru
        _
      %p177 = scmp.lt.s32.totalorder %s14, 2
      // Predicated region
      $region29: #{seq2sql_v1_agg_forward.1} parent=5 // pred_check
        %p178 = pneg %p177
      $region30: #{seq2sql_v1_agg_forward.1} parent=5 // pred_check_branch
        %180 = sbr.rel (%p178) target = $region32
      $region31: #{seq2sql_v1_agg_forward.1} parent=5 // pred_region
        // Predicated region
        $region33: #{seq2sql_v1_agg_forward.1} parent=31 // pred_check
          %p181 = pneg %p34
        $region34: #{seq2sql_v1_agg_forward.1} parent=31 // pred_check_branch
          %183 = sbr.rel (%p181) target = $region36
        $region35: #{seq2sql_v1_agg_forward.1} parent=31 // pred_region
          %p184 = scmp.lt.s32.totalorder %s14, 1
          %s185 = scalar_select %p184, %s14, 1
          %s186 = smul.addr %s185, 2
          %s187 = smul.addr %s186, 4
          %s188 = scalar_lea.vmem %s0, %s187
        $region36: #{seq2sql_v1_agg_forward.1} parent=31 // pred_fallthru
          _
      $region32: #{seq2sql_v1_agg_forward.1} parent=5 // pred_fallthru
        _
      %p189 = scmp.le.s32.totalorder 1, %s14
      %p190 = scmp.lt.s32.totalorder %s14, 3
      %p191 = pnand %p189, %p190
      %p192 = pneg %p191
      // Predicated region
      $region37: #{seq2sql_v1_agg_forward.1} parent=5 // pred_check
        _
      $region38: #{seq2sql_v1_agg_forward.1} parent=5 // pred_check_branch
        %194 = sbr.rel (%p191) target = $region40
      $region39: #{seq2sql_v1_agg_forward.1} parent=5 // pred_region
        %s195 = ssub.s32 %s14, 1
        %p196 = scmp.lt.s32.totalorder %s19, 1
        %s197 = scalar_select %p196, %s19, 1
        %s198 = smul.addr %s197, 2
        %s199 = smul.addr %s198, 4
        %s200 = scalar_lea.vmem %s0, %s199
        %p201 = pneg %p40
        %p202 = pneg %p37
        %p203 = pneg %p61
        %p204 = pneg %p58
        %p205 = pneg %p82
        %p206 = pneg %p79
        %p207 = pneg %p103
        %p208 = pneg %p100
        %p209 = pneg %p124
        %p210 = pneg %p121
        %p211 = pneg %p150
        %p212 = pneg %p147
        %s213 = sand.u32 %s137, 1
        %s214 = scalar_lea.sflag [#allocation3], %s213
        %s215 = sand.u32 %s137, 1
        %s216 = scalar_lea.vmem [#allocation2], %s215
        %p217 = scmp.lt.s32.totalorder %s19, 1
        %s218 = scalar_select %p217, %s19, 1
        %s219 = smul.addr %s218, 2
        %s220 = smul.addr %s219, 4
        %s221 = scalar_lea.vmem %s0, %s220
        %v223 = vld [vmem:[%s221] sm:$0xf]
        %v224 = vld [vmem:[%s221 + $0x4] sm:$0xf]
        %v225 = vld [vmem:[%s1] sm:$0xf]
        %v226 = vld [vmem:[%s1 + $0x4] sm:$0xf]
        %v227 = vld [vmem:[%s1 + $0x8] sm:$0xf]
        %v228 = vld [vmem:[%s1 + $0xc] sm:$0xf]
        %v229 = vld [vmem:[%s1 + $0x10] sm:$0xf]
        %v230 = vld [vmem:[%s1 + $0x14] sm:$0xf]
        %v231 = vld [vmem:[%s1 + $0x18] sm:$0xf]
        %v232 = vld [vmem:[%s1 + $0x1c] sm:$0xf]
        %v233 = vld [vmem:[%s1 + $0x20] sm:$0xf]
        %v234 = vld [vmem:[%s1 + $0x24] sm:$0xf]
        %v235 = vld [vmem:[%s1 + $0x28] sm:$0xf]
        %v236 = vld [vmem:[%s1 + $0x2c] sm:$0xf]
        %v237 = vld [vmem:[%s1 + $0x30] sm:$0xf]
        %v238 = vld [vmem:[%s1 + $0x34] sm:$0xf]
        %v239 = vld [vmem:[%s1 + $0x38] sm:$0xf]
        %v240 = vld [vmem:[%s1 + $0x3c] sm:$0xf]
        %v241 = vld [vmem:[%s2] sm:$0x1]
        %v243 = vlaneseq
        %v244 = vshrl.u32 %v243, 7
        %v245 = vsub.s32 0, %v244
        %v246 = vrot.slane %v241, %v245
        %v250 = vunpack.c.l.b16 %v223
        %v251 = vunpack.c.l.b16 %v224
        %v252 = vpack.c.b16 %v251, %v250
        %v270 = vunpack.c.l.b16 %v225
        %v271 = vunpack.c.l.b16 %v226
        %v272 = vunpack.c.l.b16 %v227
        %v273 = vunpack.c.l.b16 %v228
        %v274 = vunpack.c.l.b16 %v229
        %v275 = vunpack.c.l.b16 %v230
        %v276 = vunpack.c.l.b16 %v231
        %v277 = vunpack.c.l.b16 %v232
        %v278 = vunpack.c.l.b16 %v233
        %v279 = vunpack.c.l.b16 %v234
        %v280 = vunpack.c.l.b16 %v235
        %v281 = vunpack.c.l.b16 %v236
        %v282 = vunpack.c.l.b16 %v237
        %v283 = vunpack.c.l.b16 %v238
        %v284 = vunpack.c.l.b16 %v239
        %v285 = vunpack.c.l.b16 %v240
        %v286 = vpack.c.b16 %v271, %v270
        %v287 = vpack.c.b16 %v273, %v272
        %v288 = vpack.c.b16 %v275, %v274
        %v289 = vpack.c.b16 %v277, %v276
        %v290 = vpack.c.b16 %v279, %v278
        %v291 = vpack.c.b16 %v281, %v280
        %v292 = vpack.c.b16 %v283, %v282
        %v293 = vpack.c.b16 %v285, %v284
        %302 = vmatprep.subr.bf16.mxu0 0
        %303 = vmatpush1.bf16.msra.mxu0 %v286
        %304 = vmatprep.subr.bf16.mxu0 0
        %305 = vmatpush1.bf16.msra.mxu0 %v287
        %306 = vmatprep.subr.bf16.mxu0 0
        %307 = vmatpush1.bf16.msra.mxu0 %v288
        %308 = vmatprep.subr.bf16.mxu0 0
        %309 = vmatpush1.bf16.msra.mxu0 %v289
        %310 = vmatprep.subr.bf16.mxu0 0
        %311 = vmatpush1.bf16.msra.mxu0 %v290
        %312 = vmatprep.subr.bf16.mxu0 0
        %313 = vmatpush1.bf16.msra.mxu0 %v291
        %314 = vmatprep.subr.bf16.mxu0 0
        %315 = vmatpush1.bf16.msra.mxu0 %v292
        %316 = vmatprep.subr.bf16.mxu0 0
        %317 = vmatpush1.bf16.msra.mxu0 %v293
        %318 = vmatprep.subr.bf16.mxu0 0
        %319 = vmatpush1.bf16.msra.mxu0 0
        %320 = vmatprep.subr.bf16.mxu0 0
        %321 = vmatpush1.bf16.msra.mxu0 0
        %322 = vmatprep.subr.bf16.mxu0 0
        %323 = vmatpush1.bf16.msra.mxu0 0
        %324 = vmatprep.subr.bf16.mxu0 0
        %325 = vmatpush1.bf16.msra.mxu0 0
        %326 = vmatprep.subr.bf16.mxu0 0
        %327 = vmatpush1.bf16.msra.mxu0 0
        %328 = vmatprep.subr.bf16.mxu0 0
        %329 = vmatpush1.bf16.msra.mxu0 0
        %330 = vmatprep.subr.bf16.mxu0 0
        %331 = vmatpush1.bf16.msra.mxu0 0
        %332 = vmatprep.subr.bf16.mxu0 0
        %333 = vmatpush1.bf16.msra.mxu0 0
        %334 = vmatprep.mubr.bf16.mxu0 0
        %335 = vmatmul.mubr.bf16.gmra.mrb[0].mxu0 %v252
        %v336 = vpop.f32.mrb[0].mxu0
        %v337 = vadd.f32 %v246, %v336
        %v338 = vpop.f32.mrb[0].mxu0
        %v339 = vpop.f32.mrb[0].mxu0
        %v340 = vadd.f32 %v246, %v339
        %v341 = vpop.f32.mrb[0].mxu0
        %342 = vdwg.mxu0
        %v343 = vtanh.pop %v337
        %v344 = vtanh.pop %v340
        %v345 = vpack.c.bf16 %v344, %v343
        %v346 = vld [vmem:[%s3] sm:$0xf]
        %v347 = vld [vmem:[%s3 + $0x4] sm:$0xf]
        %v348 = vld [vmem:[%s3 + $0x8] sm:$0xf]
        %v349 = vld [vmem:[%s3 + $0xc] sm:$0xf]
        %v350 = vld [vmem:[%s3 + $0x10] sm:$0xf]
        %v351 = vld [vmem:[%s3 + $0x14] sm:$0xf]
        %v352 = vld [vmem:[%s3 + $0x18] sm:$0xf]
        %v353 = vld [vmem:[%s3 + $0x1c] sm:$0xf]
        %v354 = vld [vmem:[%s3 + $0x20] sm:$0xf]
        %v355 = vld [vmem:[%s3 + $0x24] sm:$0xf]
        %v356 = vld [vmem:[%s3 + $0x28] sm:$0xf]
        %v357 = vld [vmem:[%s3 + $0x2c] sm:$0xf]
        %v358 = vld [vmem:[%s3 + $0x30] sm:$0xf]
        %v359 = vld [vmem:[%s3 + $0x34] sm:$0xf]
        %v360 = vld [vmem:[%s3 + $0x38] sm:$0xf]
        %v361 = vld [vmem:[%s3 + $0x3c] sm:$0xf]
        %v362 = vld [vmem:[%s4] sm:$0x1]
        %v364 = vlaneseq
        %v365 = vshrl.u32 %v364, 7
        %v366 = vsub.s32 0, %v365
        %v367 = vrot.slane %v362, %v366
        %v385 = vunpack.c.l.b16 %v346
        %v386 = vunpack.c.l.b16 %v347
        %v387 = vunpack.c.l.b16 %v348
        %v388 = vunpack.c.l.b16 %v349
        %v389 = vunpack.c.l.b16 %v350
        %v390 = vunpack.c.l.b16 %v351
        %v391 = vunpack.c.l.b16 %v352
        %v392 = vunpack.c.l.b16 %v353
        %v393 = vunpack.c.l.b16 %v354
        %v394 = vunpack.c.l.b16 %v355
        %v395 = vunpack.c.l.b16 %v356
        %v396 = vunpack.c.l.b16 %v357
        %v397 = vunpack.c.l.b16 %v358
        %v398 = vunpack.c.l.b16 %v359
        %v399 = vunpack.c.l.b16 %v360
        %v400 = vunpack.c.l.b16 %v361
        %v401 = vpack.c.b16 %v386, %v385
        %v402 = vpack.c.b16 %v388, %v387
        %v403 = vpack.c.b16 %v390, %v389
        %v404 = vpack.c.b16 %v392, %v391
        %v405 = vpack.c.b16 %v394, %v393
        %v406 = vpack.c.b16 %v396, %v395
        %v407 = vpack.c.b16 %v398, %v397
        %v408 = vpack.c.b16 %v400, %v399
        %417 = vmatprep.subr.bf16.mxu0 0
        %418 = vmatpush1.bf16.msra.mxu0 %v401
        %419 = vmatprep.subr.bf16.mxu0 0
        %420 = vmatpush1.bf16.msra.mxu0 %v402
        %421 = vmatprep.subr.bf16.mxu0 0
        %422 = vmatpush1.bf16.msra.mxu0 %v403
        %423 = vmatprep.subr.bf16.mxu0 0
        %424 = vmatpush1.bf16.msra.mxu0 %v404
        %425 = vmatprep.subr.bf16.mxu0 0
        %426 = vmatpush1.bf16.msra.mxu0 %v405
        %427 = vmatprep.subr.bf16.mxu0 0
        %428 = vmatpush1.bf16.msra.mxu0 %v406
        %429 = vmatprep.subr.bf16.mxu0 0
        %430 = vmatpush1.bf16.msra.mxu0 %v407
        %431 = vmatprep.subr.bf16.mxu0 0
        %432 = vmatpush1.bf16.msra.mxu0 %v408
        %433 = vmatprep.subr.bf16.mxu0 0
        %434 = vmatpush1.bf16.msra.mxu0 0
        %435 = vmatprep.subr.bf16.mxu0 0
        %436 = vmatpush1.bf16.msra.mxu0 0
        %437 = vmatprep.subr.bf16.mxu0 0
        %438 = vmatpush1.bf16.msra.mxu0 0
        %439 = vmatprep.subr.bf16.mxu0 0
        %440 = vmatpush1.bf16.msra.mxu0 0
        %441 = vmatprep.subr.bf16.mxu0 0
        %442 = vmatpush1.bf16.msra.mxu0 0
        %443 = vmatprep.subr.bf16.mxu0 0
        %444 = vmatpush1.bf16.msra.mxu0 0
        %445 = vmatprep.subr.bf16.mxu0 0
        %446 = vmatpush1.bf16.msra.mxu0 0
        %447 = vmatprep.subr.bf16.mxu0 0
        %448 = vmatpush1.bf16.msra.mxu0 0
        %449 = vmatprep.mubr.bf16.mxu0 0
        %450 = vmatmul.mubr.bf16.gmra.mrb[0].mxu0 %v345
        %v451 = vpop.f32.mrb[0].mxu0
        %v452 = vadd.f32 %v367, %v451
        %v453 = vpop.f32.mrb[0].mxu0
        %v454 = vpop.f32.mrb[0].mxu0
        %v455 = vadd.f32 %v367, %v454
        %v456 = vpop.f32.mrb[0].mxu0
        %457 = vdwg.mxu0
        %v458 = vlaneseq
        %v459 = vshrl.u32 %v458, 7
        %v460 = vadd.s32 %v459, 8
        %vm461 = vcmp.lt.s32.totalorder %v459, 8
        %vm462 = vcmp.lt.s32.totalorder %v460, 8
        %v463 = vsel %vm461, %v452, 0.0
        %v464 = vsel %vm462, %v455, 0.0
        %v465 = vadd.f32 %v463, %v464
        %v466 = vrot.slane %v465, 4
        %v467 = vadd.f32 %v465, %v466
        %v468 = vrot.slane %v467, 2
        %v469 = vadd.f32 %v467, %v468
        %v470 = vrot.slane %v469, 1
        %v471 = vadd.f32 %v469, %v470
        %472 = vst [vmem:[%s216] sm:$0x1] %v471
        %s473 = sand.u32 %s137, 1
        %s474 = scalar_lea.sflag [#allocation3], %s473
        %s475 = sand.u32 %s137, 1
        %s476 = scalar_lea.vmem [#allocation2], %s475
        // Predicated region
        $region41: #{seq2sql_v1_agg_forward.1} parent=39 // pred_check
          %p477 = pneg %p147
        $region42: #{seq2sql_v1_agg_forward.1} parent=39 // pred_check_branch
          %479 = sbr.rel (%p477) target = $region44
        $region43: #{seq2sql_v1_agg_forward.1} parent=39 // pred_region
          %s481 = ssub.s32 16, 16
          %482 = vsyncadd %s474, %s481
          %s483 = smul.addr %s19, 16
          %s484 = scalar_lea.hbm %s5, %s483
          %s486 = sshll.u32 %s476, 4
          %s487 = int_to_ptr.vmem [resolvable:$true] %s486
          %489 = dma.vmem_to_hbm [thread:$0]  %s487, 16, %s484, %s474
        $region44: #{seq2sql_v1_agg_forward.1} parent=39 // pred_fallthru
          _
      $region40: #{seq2sql_v1_agg_forward.1} parent=5 // pred_fallthru
        _
      %p490 = scmp.le.s32.totalorder 2, %s14
      // Predicated region
      $region45: #{seq2sql_v1_agg_forward.1} parent=5 // pred_check
        %p491 = pneg %p490
      $region46: #{seq2sql_v1_agg_forward.1} parent=5 // pred_check_branch
        %493 = sbr.rel (%p491) target = $region48
      $region47: #{seq2sql_v1_agg_forward.1} parent=5 // pred_region
        %s494 = ssub.s32 %s14, 2
        // Predicated region
        $region49: #{seq2sql_v1_agg_forward.1} parent=47 // pred_check
          %p495 = pneg %p153
        $region50: #{seq2sql_v1_agg_forward.1} parent=47 // pred_check_branch
          %497 = sbr.rel (%p495) target = $region52
        $region51: #{seq2sql_v1_agg_forward.1} parent=47 // pred_region
          %s498 = sand.u32 %s138, 1
          %s499 = scalar_lea.sflag [#allocation3], %s498
          %s500 = sand.u32 %s138, 1
          %s501 = scalar_lea.vmem [#allocation2], %s500
          %502 = dma.done %s499, 16
        $region52: #{seq2sql_v1_agg_forward.1} parent=47 // pred_fallthru
          _
      $region48: #{seq2sql_v1_agg_forward.1} parent=5 // pred_fallthru
        _
    $region6: #{seq2sql_v1_agg_forward.1} parent=1 // loop_footer
      %s18 = sadd.s32 1, %s14
    $region7: #{seq2sql_v1_agg_forward.1} parent=1 // loop_footer_branch
      %13 = sbr.rel target = $region3
    $region8: #{seq2sql_v1_agg_forward.1} parent=1 // loop_exit
      _
    %503 = vsyncpa [#allocation3], 1
    %s504 = scalar_lea.sflag [#allocation3], 1
    %505 = vsyncpa %s504, 1

</llo_original>
